<compile_context>
chip_gen: v7x
topology: tpu7x:2x2x1
jax: 0.10.0
libtpu: 0.0.40
codegen_flags: <defaults>
</compile_context>

<pallas_src>
import functools
import math

import jax
import jax.numpy as jnp
from jax.experimental import pallas as pl
from jax.experimental.pallas import tpu as pltpu


def _round_up(x, m):
    return (x + m - 1) // m * m


def _pick_tile(dim_pad, cap):
    """Largest tile <= cap that divides dim_pad (dim_pad is a multiple of 128).

    Prefers multiples of 256 (fills the 2x256x256 MXUs on v6e/v7x); falls
    back to multiples of 128 (fine for v5e's 4x128x128 MXU).
    """
    if dim_pad <= cap:
        return dim_pad
    for step in (256, 128):
        t = (cap // step) * step
        while t >= step:
            if dim_pad % t == 0:
                return t
            t -= step
    return 128


def _vmem_limit_bytes(tm, tn, tk, in_bytes, out_bytes, has_acc):
    # Double-buffered inputs + double-buffered output + f32 accumulator.
    fp = 2 * (tm * tk * in_bytes + tk * tn * in_bytes + tn * 4)
    fp += 2 * tm * tn * out_bytes
    if has_acc:
        fp += tm * tn * 4
    # Floor at 32 MiB (raises v5e's 16 MiB scoped default), cap for v7x's
    # 64 MiB physical VMEM; our tile caps keep fp well under this anyway.
    return int(min(64 << 20, max(32 << 20, int(fp * 1.5))))


# --------------------------------------------------------------------------
# Kernels
# --------------------------------------------------------------------------
def _linear_kernel_single_k(x_ref, w_ref, b_ref, o_ref, *, activate_relu):
    """K fits in one tile: compute and write directly (no accumulator)."""
    y = jnp.dot(x_ref[...], w_ref[...], preferred_element_type=jnp.float32)
    y = y + b_ref[...]  # (1, tn) broadcast over (tm, tn)
    if activate_relu:
        y = jnp.maximum(y, 0.0)
    o_ref[...] = y.astype(o_ref.dtype)


def _linear_kernel_multi_k(x_ref, w_ref, b_ref, o_ref, acc_ref, *,
                           activate_relu):
    """K is tiled: f32 VMEM accumulator, bias+ReLU fused in the epilogue."""
    k = pl.program_id(2)

    @pl.when(k == 0)
    def _():
        acc_ref[...] = jnp.zeros_like(acc_ref)

    acc_ref[...] += jnp.dot(x_ref[...], w_ref[...],
                            preferred_element_type=jnp.float32)

    @pl.when(k == pl.num_programs(2) - 1)
    def _():
        y = acc_ref[...] + b_ref[...]
        if activate_relu:
            y = jnp.maximum(y, 0.0)
        o_ref[...] = y.astype(o_ref.dtype)


# --------------------------------------------------------------------------
# Parameter packing (done once at init, not per call)
# --------------------------------------------------------------------------
def pack_sonnet_linear_params(weight, bias, param_dtype=jnp.float32):
    """Pack PyTorch-layout (out, in) weight + (out,) bias into the canonical
    kernel layout: pre-transposed [k_pad, n_pad] weight (optionally bf16 in
    HBM) and a (1, n_pad) f32 bias row. Padding is zero so it contributes
    nothing to the dot product."""
    out_size, in_size = weight.shape
    k_pad = _round_up(in_size, 128)
    n_pad = _round_up(out_size, 128)
    w_t = jnp.asarray(weight, jnp.float32).T  # [in, out]
    w_t = jnp.pad(w_t, ((0, k_pad - in_size), (0, n_pad - out_size)))
    w_t = w_t.astype(param_dtype)
    b = jnp.pad(jnp.asarray(bias, jnp.float32), (0, n_pad - out_size))
    b = b.reshape(1, n_pad)
    return {"weight": w_t, "bias": b,
            "in_size": in_size, "out_size": out_size}


def init_sonnet_linear_params(key, in_size, out_size,
                              param_dtype=jnp.float32):
    """Matches SonnetLinear.reset(): truncated normal in [-2*std, 2*std] with
    std = 1/sqrt(in_size), zero bias. Returns packed (pre-transposed, padded)
    params plus the raw (out, in) weight / (out,) bias for reference checks."""
    stddev = 1.0 / math.sqrt(in_size)
    w = jax.random.truncated_normal(
        key, lower=-2.0, upper=2.0, shape=(out_size, in_size),
        dtype=jnp.float32) * stddev
    b = jnp.zeros((out_size,), dtype=jnp.float32)
    return pack_sonnet_linear_params(w, b, param_dtype=param_dtype), w, b


# --------------------------------------------------------------------------
# Forward wrapper
# --------------------------------------------------------------------------
def sonnet_linear(x, params, activate_relu=True, *,
                  tm_cap=512, tn_cap=512, tk_cap=1024):
    """Pallas implementation of SonnetLinear.forward.

    Args:
      x:       [batch, in_size] float32 activations.
      params:  dict from pack_sonnet_linear_params / init_sonnet_linear_params.
      activate_relu: apply ReLU after the affine map.
      tm_cap/tn_cap/tk_cap: upper bounds for the tile-size picker.
    Returns:
      [batch, out_size] array with x.dtype.
    """
    w = params["weight"]   # [k_pad, n_pad], f32 or bf16
    b = params["bias"]     # [1, n_pad], f32
    in_size = params["in_size"]
    out_size = params["out_size"]

    batch, xk = x.shape
    assert xk == in_size, (xk, in_size)
    k_pad, n_pad = w.shape

    compute_dtype = w.dtype          # bf16 params => bf16 MXU inputs
    in_bytes = jnp.dtype(compute_dtype).itemsize
    out_dtype = x.dtype
    out_bytes = jnp.dtype(out_dtype).itemsize

    # Sublane packing: bf16 packs 16 rows / vreg, f32 packs 8.
    sub = 16 if compute_dtype == jnp.bfloat16 else 8
    tm = min(tm_cap, _round_up(batch, sub))
    m_pad = _round_up(batch, tm)
    tn = _pick_tile(n_pad, tn_cap)
    tk = _pick_tile(k_pad, tk_cap)

    # Per-call padding of x only (it changes every call; W/b are pre-padded).
    xp = x
    if xp.dtype != compute_dtype:
        xp = xp.astype(compute_dtype)
    if (m_pad, k_pad) != (batch, xk):
        xp = jnp.pad(xp, ((0, m_pad - batch), (0, k_pad - xk)))

    grid_m = m_pad // tm
    grid_n = n_pad // tn
    grid_k = k_pad // tk

    if grid_k == 1:
        # Fast path: no K reduction -> no accumulator scratch, no pl.when.
        kernel = functools.partial(_linear_kernel_single_k,
                                   activate_relu=activate_relu)
        grid = (grid_m, grid_n)
        in_specs = [
            pl.BlockSpec((tm, tk), lambda i, j: (i, 0)),   # x tile
            pl.BlockSpec((tk, tn), lambda i, j: (0, j)),   # W^T tile
            pl.BlockSpec((1, tn), lambda i, j: (0, j)),    # bias tile
        ]
        out_specs = pl.BlockSpec((tm, tn), lambda i, j: (i, j))
        scratch = []
        dims = ("parallel", "parallel")
    else:
        kernel = functools.partial(_linear_kernel_multi_k,
                                   activate_relu=activate_relu)
        grid = (grid_m, grid_n, grid_k)
        in_specs = [
            pl.BlockSpec((tm, tk), lambda i, j, k: (i, k)),   # x tile
            pl.BlockSpec((tk, tn), lambda i, j, k: (k, j)),   # W^T tile
            pl.BlockSpec((1, tn), lambda i, j, k: (0, j)),    # bias tile
        ]
        out_specs = pl.BlockSpec((tm, tn), lambda i, j, k: (i, j))
        scratch = [pltpu.VMEM((tm, tn), jnp.float32)]
        dims = ("parallel", "parallel", "arbitrary")

    out = pl.pallas_call(
        kernel,
        out_shape=jax.ShapeDtypeStruct((m_pad, n_pad), out_dtype),
        grid_spec=pltpu.PrefetchScalarGridSpec(
            num_scalar_prefetch=0,
            grid=grid,
            in_specs=in_specs,
            out_specs=out_specs,
            scratch_shapes=scratch,
        ),
        compiler_params=pltpu.CompilerParams(
            dimension_semantics=dims,
            vmem_limit_bytes=_vmem_limit_bytes(
                tm, tn, tk, in_bytes, out_bytes, grid_k > 1)),
    )(xp, w, b)

    # Skip the slice copy when the padded layout already matches (callers in
    # a fused MLP can also keep the n-padded layout as the next layer's input).
    if (m_pad, n_pad) != (batch, out_size):
        out = out[:batch, :out_size]
    return out


# --------------------------------------------------------------------------
# Self-test
# --------------------------------------------------------------------------
if __name__ == "__main__":
    key = jax.random.PRNGKey(0)
    k_x, k_w, k_x2, k_w2 = jax.random.split(key, 4)

    # --- Small DeepCFR-like shape (single-K fast path, grid (1,1)) ---------
    batch, in_size, out_size = 8, 32, 64
    x = jax.random.normal(k_x, (batch, in_size), dtype=jnp.float32)
    params, w_raw, b_raw = init_sonnet_linear_params(k_w, in_size, out_size)

    out = jax.block_until_ready(sonnet_linear(x, params, activate_relu=True))
    ref = jnp.maximum(x @ w_raw.T + b_raw, 0.0)
    assert out.shape == (batch, out_size)
    assert jnp.allclose(out, ref, atol=1e-5, rtol=1e-5)

    # No-ReLU path.
    out_lin = jax.block_until_ready(
        sonnet_linear(x, params, activate_relu=False))
    assert jnp.allclose(out_lin, x @ w_raw.T + b_raw, atol=1e-5, rtol=1e-5)

    # --- Larger shape exercising M/N/K tiling + the accumulator path -------
    batch2, in2, out2 = 48, 640, 384
    x2 = jax.random.normal(k_x2, (batch2, in2), dtype=jnp.float32)
    params2, w2_raw, b2_raw = init_sonnet_linear_params(k_w2, in2, out2)
    b2_raw = b2_raw + 0.1
    params2 = pack_sonnet_linear_params(w2_raw, b2_raw)   # non-zero bias

    # tk_cap=128 forces a 5-step K reduction (multi-K kernel + pl.when).
    out2 = jax.block_until_ready(
        sonnet_linear(x2, params2, activate_relu=True,
                      tn_cap=128, tk_cap=128))
    ref2 = jnp.maximum(x2 @ w2_raw.T + b2_raw, 0.0)
    assert out2.shape == (batch2, out2.shape[1]) and out2.shape == ref2.shape
    assert jnp.allclose(out2, ref2, atol=1e-4, rtol=1e-4)

    # Same layer with bf16 parameter storage (v5e/v6e/v7x fast path):
    # weights live in HBM as bf16, no in-kernel cast, f32 accumulation.
    params2_bf16 = pack_sonnet_linear_params(
        w2_raw, b2_raw, param_dtype=jnp.bfloat16)
    out2_bf16 = jax.block_until_ready(
        sonnet_linear(x2, params2_bf16, activate_relu=True))
    assert jnp.allclose(out2_bf16, ref2, atol=3e-2, rtol=3e-2)

    print("KERNEL_OK")
</pallas_src>

<mosaic_0001>
module attributes {stable_mosaic.version = 11 : i64} {
  func.func @_linear_kernel_single_k(%arg0: i32, %arg1: i32, %arg2: memref<8x128xf32, #tpu.memory_space<vmem>>, %arg3: memref<128x128xf32, #tpu.memory_space<vmem>>, %arg4: memref<1x128xf32, #tpu.memory_space<vmem>>, %arg5: memref<8x128xf32, #tpu.memory_space<vmem>>) attributes {dimension_semantics = [#tpu.dimension_semantics<parallel>, #tpu.dimension_semantics<parallel>], iteration_bounds = array<i64: 1, 1>, scalar_prefetch = 0 : i64, scratch_operands = 0 : i64, tpu.core_type = #tpu.core_type<tc>, window_params = [{transform_indices = @transform_0, window_bounds = array<i64: 8, 128>}, {transform_indices = @transform_1, window_bounds = array<i64: 128, 128>}, {transform_indices = @transform_2, window_bounds = array<i64: 1, 128>}, {transform_indices = @transform_3, window_bounds = array<i64: 8, 128>}]} {
    %c0 = arith.constant 0 : index
    %c0_0 = arith.constant 0 : index
    %0 = vector.load %arg2[%c0, %c0_0] : memref<8x128xf32, #tpu.memory_space<vmem>>, vector<8x128xf32>
    %c0_1 = arith.constant 0 : index
    %c0_2 = arith.constant 0 : index
    %1 = vector.load %arg3[%c0_1, %c0_2] : memref<128x128xf32, #tpu.memory_space<vmem>>, vector<128x128xf32>
    %cst = arith.constant dense<0.000000e+00> : vector<8x128xf32>
    %2 = tpu.matmul %0, %1, %cst {dimension_numbers = #tpu.dot_dimension_numbers<[1], [0], [0], [1], [0, 0, 1, 1], [], []>} : vector<8x128xf32>, vector<128x128xf32>, vector<8x128xf32> -> vector<8x128xf32>
    %c0_3 = arith.constant 0 : index
    %c0_4 = arith.constant 0 : index
    %3 = vector.load %arg4[%c0_3, %c0_4] : memref<1x128xf32, #tpu.memory_space<vmem>>, vector<1x128xf32>
    %4 = vector.broadcast %3 : vector<1x128xf32> to vector<8x128xf32>
    %5 = arith.addf %2, %4 : vector<8x128xf32>
    %cst_5 = arith.constant 0.000000e+00 : f32
    %6 = vector.broadcast %cst_5 : f32 to vector<8x128xf32>
    %7 = arith.maximumf %5, %6 : vector<8x128xf32>
    %c0_6 = arith.constant 0 : index
    %c0_7 = arith.constant 0 : index
    %8 = vector.load %arg5[%c0_6, %c0_7] : memref<8x128xf32, #tpu.memory_space<vmem>>, vector<8x128xf32>
    tpu.vector_store %arg5[%c0_6, %c0_7], %7 {strides = array<i32>} : memref<8x128xf32, #tpu.memory_space<vmem>>, vector<8x128xf32>,
    return
  }
  func.func @transform_0(%arg0: i32, %arg1: i32) -> (i32, i32) {
    %c0_i32 = arith.constant 0 : i32
    %c0_i32_0 = arith.constant 0 : i32
    return %arg0, %c0_i32 : i32, i32
  }
  func.func @transform_1(%arg0: i32, %arg1: i32) -> (i32, i32) {
    %c0_i32 = arith.constant 0 : i32
    %c0_i32_0 = arith.constant 0 : i32
    return %c0_i32, %arg1 : i32, i32
  }
  func.func @transform_2(%arg0: i32, %arg1: i32) -> (i32, i32) {
    %c0_i32 = arith.constant 0 : i32
    %c0_i32_0 = arith.constant 0 : i32
    return %c0_i32, %arg1 : i32, i32
  }
  func.func @transform_3(%arg0: i32, %arg1: i32) -> (i32, i32) {
    %c0_i32 = arith.constant 0 : i32
    return %arg0, %arg1 : i32, i32
  }
}

</mosaic_0001>

<llo_original>
// kernel: tpu_custom_call.1
$region0: #{tpu_custom_call.1}
  #allocation0 [shape = 'u32[]', space=smem, size = 0x4, offset = 0x4, fixed_abs, tag = 'smem constant byte address 0x4 - core index']
  #allocation1 [shape = 'u32[144,128]{1,0:T(1,128)}', space=vmem, size = 0x12000, scoped, tag = 'internal scratch']
  %s0 = inlined_call_operand.hbm [shape: f32[8,128], index: 0, kind: input, shape index: {}]
  %s1 = inlined_call_operand.hbm [shape: f32[128,128], index: 1, kind: input, shape index: {}]
  %s2 = inlined_call_operand.vmem [shape: f32[1,128], index: 2, kind: input, shape index: {}]
  %s3 = inlined_call_operand.hbm [shape: f32[8,128], index: 3, kind: output, shape index: {}]
  %s4 = sld [smem:[#allocation0]]
  $region30: #{tpu_custom_call.1} parent=0
    _
  %s6 = ssub.s32 1, %s4
  %s7 = scalar_select 0, %s6, %s4
  $region1: #{tpu_custom_call.1} parent=0
    #allocation2 [shape = 'u8[4096]{0}', space=vmem, size = 0x1000, scoped, tag = 'input window, operand 0, single buffered']
    #allocation3 [shape = 's32[1]{0}', space=sflag, size = 0x4, scoped, tag = 'scoped memory for tpu_custom_call.1']
    #allocation4 [shape = 's32[1]{0}', space=sflag, size = 0x4, scoped, tag = 'scoped memory for tpu_custom_call.1']
    #allocation5 [shape = 'u8[65536]{0}', space=vmem, size = 0x10000, scoped, tag = 'input window, operand 1, single buffered']
    #allocation6 [shape = 's32[1]{0}', space=sflag, size = 0x4, scoped, tag = 'scoped memory for tpu_custom_call.1']
    #allocation7 [shape = 'u8[4096]{0}', space=vmem, size = 0x1000, scoped, tag = 'output window, operand 0, single buffered']
    %8 = vsyncpa [#allocation3], 0
    %9 = vsyncpa [#allocation6], 0
    %10 = vsyncpa [#allocation4], 0
    // Predicated region
    $region2: #{tpu_custom_call.1} parent=1 // pred_check
      _
    $region3: #{tpu_custom_call.1} parent=1 // pred_check_branch
      %12 = sbr.rel (0) target = $region5
    $region4: #{tpu_custom_call.1} parent=1 // pred_region
      %s14 = ssub.s32 128, 128
      %15 = vsyncadd [#allocation3], %s14
      %s17 = sshll.u32 [#allocation2], 4
      %s18 = int_to_ptr.vmem [resolvable:$true] %s17
      %20 = dma.hbm_to_vmem [thread:$0]  %s0, 128, %s18, [#allocation3]
    $region5: #{tpu_custom_call.1} parent=1 // pred_fallthru
      _
    // Predicated region
    $region6: #{tpu_custom_call.1} parent=1 // pred_check
      _
    $region7: #{tpu_custom_call.1} parent=1 // pred_check_branch
      %22 = sbr.rel (0) target = $region9
    $region8: #{tpu_custom_call.1} parent=1 // pred_region
      %s24 = ssub.s32 2048, 2048
      %25 = vsyncadd [#allocation6], %s24
      %s26 = sshll.u32 [#allocation5], 4
      %s27 = int_to_ptr.vmem [resolvable:$true] %s26
      %32 = dma.hbm_to_vmem [thread:$0]  %s1, 2048, %s27, [#allocation6], 128, 128, 8
    $region9: #{tpu_custom_call.1} parent=1 // pred_fallthru
      _
    // Predicated region
    $region10: #{tpu_custom_call.1} parent=1 // pred_check
      _
    $region11: #{tpu_custom_call.1} parent=1 // pred_check_branch
      %34 = sbr.rel (0) target = $region13
    $region12: #{tpu_custom_call.1} parent=1 // pred_region
      _
    $region13: #{tpu_custom_call.1} parent=1 // pred_fallthru
      _
    // Predicated region
    $region14: #{tpu_custom_call.1} parent=1 // pred_check
      _
    $region15: #{tpu_custom_call.1} parent=1 // pred_check_branch
      %36 = sbr.rel (0) target = $region17
    $region16: #{tpu_custom_call.1} parent=1 // pred_region
      %37 = dma.done [#allocation3], 128
    $region17: #{tpu_custom_call.1} parent=1 // pred_fallthru
      _
    // Predicated region
    $region18: #{tpu_custom_call.1} parent=1 // pred_check
      _
    $region19: #{tpu_custom_call.1} parent=1 // pred_check_branch
      %39 = sbr.rel (0) target = $region21
    $region20: #{tpu_custom_call.1} parent=1 // pred_region
      %40 = dma.done [#allocation6], 2048
    $region21: #{tpu_custom_call.1} parent=1 // pred_fallthru
      _
    %v41 = vld [vmem:[#allocation2] sm:$0xff]
    %v42 = vld [vmem:[#allocation5] sm:$0xff]
    %v43 = vld [vmem:[#allocation5 + $0x8] sm:$0xff]
    %v44 = vld [vmem:[#allocation5 + $0x10] sm:$0xff]
    %v45 = vld [vmem:[#allocation5 + $0x18] sm:$0xff]
    %v46 = vld [vmem:[#allocation5 + $0x20] sm:$0xff]
    %v47 = vld [vmem:[#allocation5 + $0x28] sm:$0xff]
    %v48 = vld [vmem:[#allocation5 + $0x30] sm:$0xff]
    %v49 = vld [vmem:[#allocation5 + $0x38] sm:$0xff]
    %v50 = vld [vmem:[#allocation5 + $0x40] sm:$0xff]
    %v51 = vld [vmem:[#allocation5 + $0x48] sm:$0xff]
    %v52 = vld [vmem:[#allocation5 + $0x50] sm:$0xff]
    %v53 = vld [vmem:[#allocation5 + $0x58] sm:$0xff]
    %v54 = vld [vmem:[#allocation5 + $0x60] sm:$0xff]
    %v55 = vld [vmem:[#allocation5 + $0x68] sm:$0xff]
    %v56 = vld [vmem:[#allocation5 + $0x70] sm:$0xff]
    %v57 = vld [vmem:[#allocation5 + $0x78] sm:$0xff]
    %v58 = vld [vmem:[%s2] sm:$0x1]
    %v60 = vlaneseq
    %v61 = vshrl.u32 %v60, 7
    %v62 = vsub.s32 0, %v61
    %v63 = vrot.slane %v58, %v62
    %65 = vmatprep.subr.mxu0 0.0
    %66 = vmatpush1.msra.mxu0 %v42
    %67 = vmatprep.subr.mxu0 0.0
    %68 = vmatpush1.msra.mxu0 %v43
    %69 = vmatprep.subr.mxu0 0.0
    %70 = vmatpush1.msra.mxu0 %v44
    %71 = vmatprep.subr.mxu0 0.0
    %72 = vmatpush1.msra.mxu0 %v45
    %73 = vmatprep.subr.mxu0 0.0
    %74 = vmatpush1.msra.mxu0 %v46
    %75 = vmatprep.subr.mxu0 0.0
    %76 = vmatpush1.msra.mxu0 %v47
    %77 = vmatprep.subr.mxu0 0.0
    %78 = vmatpush1.msra.mxu0 %v48
    %79 = vmatprep.subr.mxu0 0.0
    %80 = vmatpush1.msra.mxu0 %v49
    %81 = vmatprep.subr.mxu0 0.0
    %82 = vmatpush1.msra.mxu0 %v50
    %83 = vmatprep.subr.mxu0 0.0
    %84 = vmatpush1.msra.mxu0 %v51
    %85 = vmatprep.subr.mxu0 0.0
    %86 = vmatpush1.msra.mxu0 %v52
    %87 = vmatprep.subr.mxu0 0.0
    %88 = vmatpush1.msra.mxu0 %v53
    %89 = vmatprep.subr.mxu0 0.0
    %90 = vmatpush1.msra.mxu0 %v54
    %91 = vmatprep.subr.mxu0 0.0
    %92 = vmatpush1.msra.mxu0 %v55
    %93 = vmatprep.subr.mxu0 0.0
    %94 = vmatpush1.msra.mxu0 %v56
    %95 = vmatprep.subr.mxu0 0.0
    %96 = vmatpush1.msra.mxu0 %v57
    %97 = vmatprep.subr.mxu0 0.0
    %98 = vmatpush1.msra.mxu0 0.0
    %99 = vmatprep.subr.mxu0 0.0
    %100 = vmatpush1.msra.mxu0 0.0
    %101 = vmatprep.subr.mxu0 0.0
    %102 = vmatpush1.msra.mxu0 0.0
    %103 = vmatprep.subr.mxu0 0.0
    %104 = vmatpush1.msra.mxu0 0.0
    %105 = vmatprep.subr.mxu0 0.0
    %106 = vmatpush1.msra.mxu0 0.0
    %107 = vmatprep.subr.mxu0 0.0
    %108 = vmatpush1.msra.mxu0 0.0
    %109 = vmatprep.subr.mxu0 0.0
    %110 = vmatpush1.msra.mxu0 0.0
    %111 = vmatprep.subr.mxu0 0.0
    %112 = vmatpush1.msra.mxu0 0.0
    %113 = vmatprep.subr.mxu0 0.0
    %114 = vmatpush1.msra.mxu0 0.0
    %115 = vmatprep.subr.mxu0 0.0
    %116 = vmatpush1.msra.mxu0 0.0
    %117 = vmatprep.subr.mxu0 0.0
    %118 = vmatpush1.msra.mxu0 0.0
    %119 = vmatprep.subr.mxu0 0.0
    %120 = vmatpush1.msra.mxu0 0.0
    %121 = vmatprep.subr.mxu0 0.0
    %122 = vmatpush1.msra.mxu0 0.0
    %123 = vmatprep.subr.mxu0 0.0
    %124 = vmatpush1.msra.mxu0 0.0
    %125 = vmatprep.subr.mxu0 0.0
    %126 = vmatpush1.msra.mxu0 0.0
    %127 = vmatprep.subr.mxu0 0.0
    %128 = vmatpush1.msra.mxu0 0.0
    %129 = vmatprep.mubr.f32.mxu0 0.0
    %130 = vmatmul.mubr.f32.gmra.mrb[0].mxu0 %v41
    %v131 = vpop.f32.mrb[0].mxu0
    %v132 = vadd.f32 %v63, %v131
    %v133 = vpop.f32.mrb[0].mxu0
    %134 = vdwg.mxu0
    %v135 = vmax.f32 %v132, 0.0
    %136 = vst [vmem:[#allocation7] sm:$0xff] %v135
    // Predicated region
    $region22: #{tpu_custom_call.1} parent=1 // pred_check
      _
    $region23: #{tpu_custom_call.1} parent=1 // pred_check_branch
      %138 = sbr.rel (0) target = $region25
    $region24: #{tpu_custom_call.1} parent=1 // pred_region
      %s140 = ssub.s32 128, 128
      %141 = vsyncadd [#allocation4], %s140
      %s143 = sshll.u32 [#allocation7], 4
      %s144 = int_to_ptr.vmem [resolvable:$true] %s143
      %146 = dma.vmem_to_hbm [thread:$0]  %s144, 128, %s3, [#allocation4]
    $region25: #{tpu_custom_call.1} parent=1 // pred_fallthru
      _
    // Predicated region
    $region26: #{tpu_custom_call.1} parent=1 // pred_check
      _
    $region27: #{tpu_custom_call.1} parent=1 // pred_check_branch
      %148 = sbr.rel (0) target = $region29
    $region28: #{tpu_custom_call.1} parent=1 // pred_region
      %149 = dma.done [#allocation4], 128
    $region29: #{tpu_custom_call.1} parent=1 // pred_fallthru
      _
    %150 = vsyncpa [#allocation3], 1
    %151 = vsyncpa [#allocation6], 1
    %152 = vsyncpa [#allocation4], 1

</llo_original>
